<compile_context>
chip_gen: v7x
topology: tpu7x:2x2x1
jax: 0.10.0
libtpu: 0.0.40
codegen_flags: <defaults>
</compile_context>

<pallas_src>
import jax
import jax.numpy as jnp
from jax.experimental import pallas as pl
from jax.experimental.pallas import tpu as pltpu


def _flow_copy_kernel(z_ref, o_ref):
    # Identity on the VMEM-resident tile.  Real Flow layers (couplings, 1x1
    # convs, permutations) would fuse their compute here so MXU/VPU work
    # overlaps the same DMA instead of paying an extra HBM round trip.
    o_ref[...] = z_ref[...]


# Prefer the widest lane-dense view (large multiple of 128).
_LANE_CANDIDATES = (2048, 1024, 512, 256, 128)
# Per-buffer tile cap.  Double-buffered input + double-buffered output
# => ~4 x cap = 8 MiB of VMEM: fits v5e (16 MiB scoped), v6e (32 MiB scoped)
# and v7x (32 MiB scoped of 64 MiB physical) without raising vmem_limit_bytes.
_TILE_BYTES_CAP = 2 * 1024 * 1024


def _pallas_flow_apply_2d(z2d):
    """Row-tiled, pipelined Pallas copy of a lane-dense 2-D slab."""
    rows, cols = z2d.shape
    itemsize = jnp.dtype(z2d.dtype).itemsize

    # Row tile: multiple of 8 sublanes, sized so one tile stays under the cap.
    tr = _TILE_BYTES_CAP // max(1, cols * itemsize)
    tr = max(8, (tr // 8) * 8)
    if tr >= rows:
        tr = rows  # single full-extent block (still legal: equals array dim)
    grid = (pl.cdiv(rows, tr),)

    return pl.pallas_call(
        _flow_copy_kernel,
        out_shape=jax.ShapeDtypeStruct((rows, cols), z2d.dtype),
        grid=grid,
        in_specs=[pl.BlockSpec((tr, cols), lambda i: (i, 0))],
        out_specs=pl.BlockSpec((tr, cols), lambda i: (i, 0)),
        input_output_aliases={0: 0},
        compiler_params=pltpu.CompilerParams(
            dimension_semantics=("parallel",),  # shards grid across v7x's 2 TCs
        ),
    )(z2d)


def flow_materialize(z):
    """Route z through the Pallas TPU kernel, preserving shape/dtype.

    The tensor is viewed as (rows, LANES) with LANES a large multiple of 128 so
    every store is a full-width (unmasked) lane-dense vst.  Shapes whose total
    element count is not 128-divisible are padded and sliced back (correct,
    slightly slower).
    """
    orig_shape = z.shape
    flat = z.reshape(-1)
    total = flat.shape[0]

    lanes = next((c for c in _LANE_CANDIDATES if total % c == 0), None)
    if lanes is None:
        lanes = 128
        padded = ((total + lanes - 1) // lanes) * lanes
        flat_p = jnp.pad(flat, (0, padded - total))
        out = _pallas_flow_apply_2d(flat_p.reshape(padded // lanes, lanes))
        out = out.reshape(-1)[:total]
    else:
        out = _pallas_flow_apply_2d(flat.reshape(total // lanes, lanes))
        out = out.reshape(-1)

    return out.reshape(orig_shape)


class Flow:
    """
    JAX/Pallas port of the DDF `Flow` container.

    Stores coupling / splitprior / squeeze / permutation layers and applies them
    in order (forward) or reversed order (reverse).  With no layers added —
    exactly what the reference __init__ produces — forward(z) == (z, pys, ys)
    and no kernel is launched (no wasted HBM traffic).
    """

    def __init__(self, args=None):
        # Reference code: self.layers = []; self.layers_ml = ModuleList([])
        self.layers = []

    def add_layer(self, layer):
        # TODO(synk): Squeeze / CategoricalSplitPrior / Coupling / Permutation
        # are defined in other DDF source files not part of this module, so the
        # isinstance() assertion from the PyTorch code cannot be reproduced.
        self.layers.append(layer)

    def forward(self, z, pys=(), ys=(), reverse=False):
        if not reverse:
            for layer in self.layers:
                if getattr(layer, "is_split_prior", False):
                    py, y, z = layer(z)
                    pys += (py,)
                    ys += (y,)
                else:
                    z = layer(z)
        else:
            for layer in reversed(list(self.layers)):
                z = layer(z, reverse=True)

        # Perf: the empty flow is the identity on z — return it directly rather
        # than launching an identity HBM->VMEM->HBM copy.  When real layers are
        # added, their compute should be fused into the kernel body used by
        # flow_materialize instead of an extra pass over z.
        return (z, pys, ys)

    __call__ = forward


if __name__ == "__main__":
    key = jax.random.PRNGKey(0)
    # Small NCHW input consistent with an image flow: batch=2, channels=4, 16x16.
    z = jax.random.normal(key, (2, 4, 16, 16), dtype=jnp.float32)

    # 1) Module semantics: empty Flow forward is identity, no kernel launched.
    flow = Flow(args=None)
    z_out, pys, ys = flow(z, pys=(), ys=(), reverse=False)
    z_out = jax.block_until_ready(z_out)
    assert z_out.shape == z.shape and z_out.dtype == z.dtype
    assert pys == () and ys == ()
    assert bool(jnp.allclose(z_out, z)), "empty Flow forward must be identity on z"

    # 2) Exercise the Pallas kernel once (the tiled, pipelined on-chip data
    #    path a fused layer would use) and verify bit-exact identity.
    z_mat = jax.block_until_ready(flow_materialize(z))
    assert z_mat.shape == z.shape and z_mat.dtype == z.dtype
    assert bool(jnp.array_equal(z_mat, z)), "Pallas materialize must be identity"

    print("KERNEL_OK")
</pallas_src>

<mosaic_0001>
module attributes {stable_mosaic.version = 11 : i64} {
  func.func @_flow_copy_kernel(%arg0: i32, %arg1: memref<1x2048xf32, #tpu.memory_space<vmem>>, %arg2: memref<1x2048xf32, #tpu.memory_space<vmem>>) attributes {dimension_semantics = [#tpu.dimension_semantics<parallel>], iteration_bounds = array<i64: 1>, scalar_prefetch = 0 : i64, scratch_operands = 0 : i64, tpu.core_type = #tpu.core_type<tc>, window_params = [{transform_indices = @transform_0, window_bounds = array<i64: 1, 2048>}, {transform_indices = @transform_1, window_bounds = array<i64: 1, 2048>}]} {
    %c0 = arith.constant 0 : index
    %c0_0 = arith.constant 0 : index
    %0 = vector.load %arg1[%c0, %c0_0] : memref<1x2048xf32, #tpu.memory_space<vmem>>, vector<1x2048xf32>
    %c0_1 = arith.constant 0 : index
    %c0_2 = arith.constant 0 : index
    %1 = vector.load %arg2[%c0_1, %c0_2] : memref<1x2048xf32, #tpu.memory_space<vmem>>, vector<1x2048xf32>
    tpu.vector_store %arg2[%c0_1, %c0_2], %0 {strides = array<i32>} : memref<1x2048xf32, #tpu.memory_space<vmem>>, vector<1x2048xf32>,
    return
  }
  func.func @transform_0(%arg0: i32) -> (i32, i32) {
    %c0_i32 = arith.constant 0 : i32
    %c0_i32_0 = arith.constant 0 : i32
    return %arg0, %c0_i32 : i32, i32
  }
  func.func @transform_1(%arg0: i32) -> (i32, i32) {
    %c0_i32 = arith.constant 0 : i32
    %c0_i32_0 = arith.constant 0 : i32
    return %arg0, %c0_i32 : i32, i32
  }
}

</mosaic_0001>

<llo_original>
// kernel: tpu_custom_call.1
$region0: #{tpu_custom_call.1}
  #allocation0 [shape = 'u32[]', space=smem, size = 0x4, offset = 0x4, fixed_abs, tag = 'smem constant byte address 0x4 - core index']
  #allocation1 [shape = 'u32[144,128]{1,0:T(1,128)}', space=vmem, size = 0x12000, scoped, tag = 'internal scratch']
  %s0 = inlined_call_operand.hbm [shape: f32[1,2048], index: 0, kind: input, shape index: {}, may-alias: {0,1}]
  %s1 = inlined_call_operand.hbm [shape: f32[1,2048], index: 1, kind: output, shape index: {}, may-alias: {0,1}]
  %s2 = sld [smem:[#allocation0]]
  $region18: #{tpu_custom_call.1} parent=0
    _
  %s4 = ssub.s32 1, %s2
  %s5 = scalar_select 0, %s4, %s2
  $region1: #{tpu_custom_call.1} parent=0
    #allocation2 [shape = 'u8[8192]{0}', space=vmem, size = 0x2000, scoped, tag = 'input window, operand 0, single buffered']
    #allocation3 [shape = 's32[1]{0}', space=sflag, size = 0x4, scoped, tag = 'scoped memory for tpu_custom_call.1']
    #allocation4 [shape = 's32[1]{0}', space=sflag, size = 0x4, scoped, tag = 'scoped memory for tpu_custom_call.1']
    #allocation5 [shape = 'u8[8192]{0}', space=vmem, size = 0x2000, scoped, tag = 'output window, operand 0, single buffered']
    %6 = vsyncpa [#allocation3], 0
    %7 = vsyncpa [#allocation4], 0
    // Predicated region
    $region2: #{tpu_custom_call.1} parent=1 // pred_check
      _
    $region3: #{tpu_custom_call.1} parent=1 // pred_check_branch
      %9 = sbr.rel (0) target = $region5
    $region4: #{tpu_custom_call.1} parent=1 // pred_region
      %s11 = ssub.s32 256, 256
      %12 = vsyncadd [#allocation3], %s11
      %s14 = sshll.u32 [#allocation2], 4
      %s15 = int_to_ptr.vmem [resolvable:$true] %s14
      %17 = dma.hbm_to_vmem [thread:$0]  %s0, 256, %s15, [#allocation3]
    $region5: #{tpu_custom_call.1} parent=1 // pred_fallthru
      _
    // Predicated region
    $region6: #{tpu_custom_call.1} parent=1 // pred_check
      _
    $region7: #{tpu_custom_call.1} parent=1 // pred_check_branch
      %19 = sbr.rel (0) target = $region9
    $region8: #{tpu_custom_call.1} parent=1 // pred_region
      %20 = dma.done [#allocation3], 256
    $region9: #{tpu_custom_call.1} parent=1 // pred_fallthru
      _
    %v21 = vld [vmem:[#allocation2] sm:$0xff]
    %v22 = vld [vmem:[#allocation2 + $0x8] sm:$0xff]
    %23 = vst [vmem:[#allocation5] sm:$0xff] %v21
    %24 = vst [vmem:[#allocation5 + $0x8] sm:$0xff] %v22
    // Predicated region
    $region10: #{tpu_custom_call.1} parent=1 // pred_check
      _
    $region11: #{tpu_custom_call.1} parent=1 // pred_check_branch
      %26 = sbr.rel (0) target = $region13
    $region12: #{tpu_custom_call.1} parent=1 // pred_region
      %s28 = ssub.s32 256, 256
      %29 = vsyncadd [#allocation4], %s28
      %s31 = sshll.u32 [#allocation5], 4
      %s32 = int_to_ptr.vmem [resolvable:$true] %s31
      %34 = dma.vmem_to_hbm [thread:$0]  %s32, 256, %s1, [#allocation4]
    $region13: #{tpu_custom_call.1} parent=1 // pred_fallthru
      _
    // Predicated region
    $region14: #{tpu_custom_call.1} parent=1 // pred_check
      _
    $region15: #{tpu_custom_call.1} parent=1 // pred_check_branch
      %36 = sbr.rel (0) target = $region17
    $region16: #{tpu_custom_call.1} parent=1 // pred_region
      %37 = dma.done [#allocation4], 256
    $region17: #{tpu_custom_call.1} parent=1 // pred_fallthru
      _
    %38 = vsyncpa [#allocation3], 1
    %39 = vsyncpa [#allocation4], 1

</llo_original>
